<compile_context>
chip_gen: v6e
topology: v6e:2x2x1
jax: 0.10.0
libtpu: 0.0.40
codegen_flags: <defaults>
</compile_context>

<pallas_src>
import functools

import jax
import jax.numpy as jnp
from jax.experimental import pallas as pl
from jax.experimental.pallas import tpu as pltpu


def _fused_conv_kernel(p_ref, m_ref, o_ref):
    """o[b] = M @ P[b]  — 3x3 + 1x1 + identity + bias, all folded into M.

    p_ref: (B_TILE, K_pad, LANE_TILE)  im2col patches (+ ones row, zero-padded K)
    m_ref: (Cout,   K_pad)             fused weights  (+ bias column, zero-padded K)
    o_ref: (B_TILE, Cout, LANE_TILE)   lane-dense output tile (f32)
    """
    for b in range(o_ref.shape[0]):  # B_TILE is a small static constant
        o_ref[b] = jnp.dot(
            m_ref[...], p_ref[b], preferred_element_type=jnp.float32
        ).astype(o_ref.dtype)


@functools.partial(jax.jit, static_argnames=("compute_dtype",))
def residual_module_forward(x_nchw, w3_oihw, b3, w1_oihw, b1,
                            compute_dtype=jnp.bfloat16):
    """conv3x3_same(x) + conv1x1(x) + x  with PyTorch NCHW semantics."""
    N, Cin, H, W = x_nchw.shape
    Cout = w3_oihw.shape[0]
    assert Cin == Cout, "identity residual requires in_channels == out_channels"
    HW = H * W
    assert HW % 128 == 0, "H*W must be a multiple of 128 for lane-dense stores"

    # ---- algebraic fusion (exact, done in f32) -----------------------------
    eye = jnp.eye(Cout, Cin, dtype=w3_oihw.dtype)
    w_eff = w3_oihw.at[:, :, 1, 1].add(w1_oihw[:, :, 0, 0] + eye)  # (Cout,Cin,3,3)
    b_eff = b3 + b1                                                # (Cout,)

    # M[o, tap*Cin + c] = w_eff[o, c, dy, dx]; next column = fused bias;
    # remaining columns zero-padded so K_pad is a multiple of 8.
    K = 9 * Cin + 1
    k_pad = -(-K // 8) * 8
    m = jnp.transpose(w_eff, (0, 2, 3, 1)).reshape(Cout, 9 * Cin)
    m = jnp.concatenate([m, b_eff[:, None]], axis=1)               # (Cout, K)
    m = jnp.pad(m, ((0, 0), (0, k_pad - K))).astype(compute_dtype)  # (Cout, K_pad)

    # ---- im2col straight from NCHW (no layout transposes) ------------------
    x_pad = jnp.pad(x_nchw, ((0, 0), (0, 0), (1, 1), (1, 1)))
    taps = [x_pad[:, :, dy:dy + H, dx:dx + W]
            for dy in range(3) for dx in range(3)]
    p = jnp.concatenate(taps, axis=1).reshape(N, 9 * Cin, HW)
    p = jnp.concatenate([p, jnp.ones((N, 1, HW), p.dtype)], axis=1)   # ones-row bias
    p = jnp.pad(p, ((0, 0), (0, k_pad - K), (0, 0))).astype(compute_dtype)

    # ---- tiling: lane tile (multiple of 128), optional batch folding -------
    lane_tile = min(HW, 2048)
    while HW % lane_tile:
        lane_tile -= 128
    n_lane = HW // lane_tile
    b_tile = 1
    # Fold batches per step only if per-step lane work is tiny AND we keep
    # >= 2 grid steps (so v7x's second TensorCore stays fed).
    while (b_tile * 2 <= N and N % (b_tile * 2) == 0
           and b_tile * lane_tile < 512
           and (N // (b_tile * 2)) * n_lane >= 2):
        b_tile *= 2

    out_dtype = x_nchw.dtype
    bytes_accessed = (p.size * p.dtype.itemsize
                      + m.size * m.dtype.itemsize
                      + N * Cout * HW * jnp.dtype(out_dtype).itemsize)

    out = pl.pallas_call(
        _fused_conv_kernel,
        out_shape=jax.ShapeDtypeStruct((N, Cout, HW), out_dtype),
        grid=(N // b_tile, n_lane),
        in_specs=[
            pl.BlockSpec((b_tile, k_pad, lane_tile), lambda b, l: (b, 0, l)),
            pl.BlockSpec((Cout, k_pad), lambda b, l: (0, 0)),  # weights resident
        ],
        out_specs=pl.BlockSpec((b_tile, Cout, lane_tile), lambda b, l: (b, 0, l)),
        compiler_params=pltpu.CompilerParams(
            dimension_semantics=("parallel", "parallel"),
        ),
        cost_estimate=pl.CostEstimate(
            flops=2 * N * Cout * k_pad * HW,
            transcendentals=0,
            bytes_accessed=bytes_accessed,
        ),
    )(p, m)

    # No channel padding was introduced, so NCHW is a plain reshape (no slice,
    # no transpose — no extra HBM pass over the output).
    return out.reshape(N, Cout, H, W)


def _reference(x_nchw, w3_oihw, b3, w1_oihw, b1):
    """Pure-JAX reference with the same NCHW semantics as the PyTorch module."""
    dn = ("NCHW", "OIHW", "NCHW")
    y3 = jax.lax.conv_general_dilated(
        x_nchw, w3_oihw, (1, 1), "SAME", dimension_numbers=dn
    ) + b3.reshape(1, -1, 1, 1)
    y1 = jax.lax.conv_general_dilated(
        x_nchw, w1_oihw, (1, 1), "SAME", dimension_numbers=dn
    ) + b1.reshape(1, -1, 1, 1)
    return y3 + y1 + x_nchw


if __name__ == "__main__":
    # Small shapes consistent with the module (in_channels == out_channels).
    N, C, H, W, KS = 2, 4, 16, 16, 3

    key = jax.random.PRNGKey(0)
    k_x, k_w3, k_b3, k_w1, k_b1 = jax.random.split(key, 5)

    # PyTorch-style uniform(-bound, bound) init, deterministic.
    bound3 = 1.0 / (C * KS * KS) ** 0.5
    bound1 = 1.0 / (C * 1 * 1) ** 0.5
    w3 = jax.random.uniform(k_w3, (C, C, KS, KS), jnp.float32, -bound3, bound3)
    b3 = jax.random.uniform(k_b3, (C,), jnp.float32, -bound3, bound3)
    w1 = jax.random.uniform(k_w1, (C, C, 1, 1), jnp.float32, -bound1, bound1)
    b1 = jax.random.uniform(k_b1, (C,), jnp.float32, -bound1, bound1)

    x = jax.random.normal(k_x, (N, C, H, W), jnp.float32)

    ref = _reference(x, w3, b3, w1, b1)

    # f32 path: tight correctness check (exact same math as the module).
    out_f32 = jax.block_until_ready(
        residual_module_forward(x, w3, b3, w1, b1, compute_dtype=jnp.float32))
    assert out_f32.shape == (N, C, H, W)
    assert jnp.allclose(out_f32, ref, atol=1e-4, rtol=1e-4), "f32 mismatch vs reference"

    # bf16 path: halves HBM bytes for the im2col slab, f32 accumulation on MXU;
    # tolerance loosened accordingly (per review correctness note).
    out_bf16 = jax.block_until_ready(
        residual_module_forward(x, w3, b3, w1, b1, compute_dtype=jnp.bfloat16))
    assert out_bf16.shape == (N, C, H, W)
    assert jnp.allclose(out_bf16, ref, atol=5e-2, rtol=5e-2), "bf16 mismatch vs reference"

    print("KERNEL_OK")
</pallas_src>

<mosaic_0001>
module attributes {stable_mosaic.version = 11 : i64} {
  func.func @_fused_conv_kernel(%arg0: i32, %arg1: i32, %arg2: memref<1x40x256xf32, #tpu.memory_space<vmem>>, %arg3: memref<4x40xf32, #tpu.memory_space<vmem>>, %arg4: memref<1x4x256xf32, #tpu.memory_space<vmem>>) attributes {dimension_semantics = [#tpu.dimension_semantics<parallel>, #tpu.dimension_semantics<parallel>], iteration_bounds = array<i64: 2, 1>, scalar_prefetch = 0 : i64, scratch_operands = 0 : i64, tpu.core_type = #tpu.core_type<tc>, window_params = [{transform_indices = @transform_0, window_bounds = array<i64: 1, 40, 256>}, {pipeline_mode = #tpu.pipeline_mode<synchronous>, transform_indices = @transform_1, window_bounds = array<i64: 4, 40>}, {transform_indices = @transform_2, window_bounds = array<i64: 1, 4, 256>}]} {
    %c0 = arith.constant 0 : index
    %c0_0 = arith.constant 0 : index
    %0 = vector.load %arg3[%c0, %c0_0] : memref<4x40xf32, #tpu.memory_space<vmem>>, vector<4x40xf32>
    %c0_1 = arith.constant 0 : index
    %c0_2 = arith.constant 0 : index
    %c0_3 = arith.constant 0 : index
    %1 = vector.load %arg2[%c0_1, %c0_2, %c0_3] : memref<1x40x256xf32, #tpu.memory_space<vmem>>, vector<1x40x256xf32>
    %2 = vector.shape_cast %1 : vector<1x40x256xf32> to vector<40x256xf32>
    %cst = arith.constant dense<0.000000e+00> : vector<4x256xf32>
    %3 = tpu.matmul %0, %2, %cst {dimension_numbers = #tpu.dot_dimension_numbers<[1], [0], [0], [1], [0, 0, 1, 1], [], []>} : vector<4x40xf32>, vector<40x256xf32>, vector<4x256xf32> -> vector<4x256xf32>
    %c0_4 = arith.constant 0 : index
    %c0_5 = arith.constant 0 : index
    %c0_6 = arith.constant 0 : index
    %4 = vector.load %arg4[%c0_4, %c0_5, %c0_6] : memref<1x4x256xf32, #tpu.memory_space<vmem>>, vector<1x4x256xf32>
    %5 = vector.shape_cast %4 : vector<1x4x256xf32> to vector<4x256xf32>
    %6 = vector.shape_cast %3 : vector<4x256xf32> to vector<1x4x256xf32>
    tpu.vector_store %arg4[%c0_4, %c0_5, %c0_6], %6 {strides = array<i32>} : memref<1x4x256xf32, #tpu.memory_space<vmem>>, vector<1x4x256xf32>,
    return
  }
  func.func @transform_0(%arg0: i32, %arg1: i32) -> (i32, i32, i32) {
    %c0_i32 = arith.constant 0 : i32
    %c0_i32_0 = arith.constant 0 : i32
    return %arg0, %c0_i32, %arg1 : i32, i32, i32
  }
  func.func @transform_1(%arg0: i32, %arg1: i32) -> (i32, i32) {
    %c0_i32 = arith.constant 0 : i32
    %c0_i32_0 = arith.constant 0 : i32
    %c0_i32_1 = arith.constant 0 : i32
    return %c0_i32, %c0_i32_0 : i32, i32
  }
  func.func @transform_2(%arg0: i32, %arg1: i32) -> (i32, i32, i32) {
    %c0_i32 = arith.constant 0 : i32
    %c0_i32_0 = arith.constant 0 : i32
    return %arg0, %c0_i32, %arg1 : i32, i32, i32
  }
}

</mosaic_0001>

<llo_original>
// kernel: residual_module_forward.1
$region0: #{residual_module_forward.1}
  #allocation0 [shape = 'u32[]', space=smem, size = 0x4, offset = 0x4, fixed_abs, tag = 'smem constant byte address 0x4 - core index']
  #allocation1 [shape = 'u32[144,128]{1,0:T(1,128)}', space=vmem, size = 0x12000, scoped, tag = 'internal scratch']
  %s0 = inlined_call_operand.vmem [shape: f32[2,40,256], index: 0, kind: input, shape index: {}]
  %s1 = inlined_call_operand.vmem [shape: f32[4,40], index: 1, kind: input, shape index: {}]
  %s2 = inlined_call_operand.vmem [shape: f32[2,4,256], index: 2, kind: output, shape index: {}]
  %s3 = sld [smem:[#allocation0]]
  $region41: #{residual_module_forward.1} parent=0
    _
  %s5 = ssub.s32 1, %s3
  %s6 = scalar_select 0, %s5, %s3
  loop: start=0, step=1, limit=4
  $region2: #{residual_module_forward.1} parent=0 // loop_pre_header
    _
  $region3: #{residual_module_forward.1} parent=0 // loop_header
    %s8 = sphi 0, %s12
    %p9 = scmp.ge.s32.totalorder %s8, 4
    %s15 = sphi 0, %s27
    %s16 = sphi 0, %s23
    %s17 = sphi 0, %s15
    %s18 = sphi 0, %s16
    %s19 = sphi 0, %s17
    %s20 = sphi 0, %s18
    %s32 = sphi 0, %s34
    %s35 = sphi 0, %s32
    %s36 = sphi 0, %s35
    %s52 = sphi 0, %s36
    %s56 = sphi 0, %s56
    %s58 = sphi 0, %s56
    %s59 = sphi 0, %s58
    %s73 = sphi 0, %s59
    %s81 = sphi 0, %s83
    %s84 = sphi 0, %s81
    %s85 = sphi 0, %s84
    %s101 = sphi 0, %s85
  $region4: #{residual_module_forward.1} parent=0 // loop_header_branch
    %11 = sbr.rel (%p9) target = $region8
  $region5: #{residual_module_forward.1} parent=0 // loop_body
    %s13 = ssub.s32 %s8, 1
    %s14 = ssub.s32 %s8, 2
    %s21 = sadd.s32 1, %s16
    %p22 = scmp.ge.s32.totalorder %s21, 1
    %s23 = scalar_select %p22, 0, %s21
    %s24 = sadd.s32 1, %s15
    %s25 = scalar_select %p22, %s24, %s15
    %p26 = scmp.ge.s32.totalorder %s25, 2
    %s27 = scalar_select %p26, 0, %s25
    %s28 = ssub.s32 %s15, %s27
    %s29 = ssub.s32 %s16, %s23
    %s30 = sor.u32 %s28, %s29
    %p31 = scmp.eq.s32.totalorder %s30, 0
    %s33 = sadd.s32 %s32, 1
    %s34 = scalar_select %p31, %s32, %s33
    %p37 = pneg %p31
    %p38 = scmp.eq.s32.totalorder %s8, 1
    %p39 = por %p37, %p38
    %p40 = scmp.ne.s32.totalorder %s32, %s35
    %p41 = scmp.eq.s32.totalorder %s8, 0
    %p42 = por %p40, %p41
    %p43 = scmp.ne.s32.totalorder %s32, %s35
    %p44 = scmp.eq.s32.totalorder %s13, 1
    %p45 = por %p43, %p44
    %p46 = scmp.ne.s32.totalorder %s35, %s36
    %p47 = scmp.eq.s32.totalorder %s13, 0
    %p48 = por %p46, %p47
    %p49 = scmp.ne.s32.totalorder %s35, %s36
    %p50 = scmp.eq.s32.totalorder %s14, 1
    %p51 = por %p49, %p50
    %p53 = scmp.ne.s32.totalorder %s36, %s52
    %p54 = scmp.eq.s32.totalorder %s14, 0
    %p55 = por %p53, %p54
    %s57 = sadd.s32 %s56, 1
    %p60 = scmp.eq.s32.totalorder %s8, 1
    %p61 = scmp.ne.s32.totalorder %s56, %s58
    %p62 = scmp.eq.s32.totalorder %s8, 0
    %p63 = por %p61, %p62
    %p64 = scmp.ne.s32.totalorder %s56, %s58
    %p65 = scmp.eq.s32.totalorder %s13, 1
    %p66 = por %p64, %p65
    %p67 = scmp.ne.s32.totalorder %s58, %s59
    %p68 = scmp.eq.s32.totalorder %s13, 0
    %p69 = por %p67, %p68
    %p70 = scmp.ne.s32.totalorder %s58, %s59
    %p71 = scmp.eq.s32.totalorder %s14, 1
    %p72 = por %p70, %p71
    %p74 = scmp.ne.s32.totalorder %s59, %s73
    %p75 = scmp.eq.s32.totalorder %s14, 0
    %p76 = por %p74, %p75
    %s77 = ssub.s32 %s15, %s27
    %s78 = ssub.s32 %s16, %s23
    %s79 = sor.u32 %s77, %s78
    %p80 = scmp.eq.s32.totalorder %s79, 0
    %s82 = sadd.s32 %s81, 1
    %s83 = scalar_select %p80, %s81, %s82
    %p86 = pneg %p80
    %p87 = scmp.eq.s32.totalorder %s8, 1
    %p88 = por %p86, %p87
    %p89 = scmp.ne.s32.totalorder %s81, %s84
    %p90 = scmp.eq.s32.totalorder %s8, 0
    %p91 = por %p89, %p90
    %p92 = scmp.ne.s32.totalorder %s81, %s84
    %p93 = scmp.eq.s32.totalorder %s13, 1
    %p94 = por %p92, %p93
    %p95 = scmp.ne.s32.totalorder %s84, %s85
    %p96 = scmp.eq.s32.totalorder %s13, 0
    %p97 = por %p95, %p96
    %p98 = scmp.ne.s32.totalorder %s84, %s85
    %p99 = scmp.eq.s32.totalorder %s14, 1
    %p100 = por %p98, %p99
    %p102 = scmp.ne.s32.totalorder %s85, %s101
    %p103 = scmp.eq.s32.totalorder %s14, 0
    %p104 = por %p102, %p103
    %p105 = scmp.le.s32.totalorder 1, %s8
    %p106 = scmp.lt.s32.totalorder %s8, 3
    %p107 = pnand %p105, %p106
    %p108 = pneg %p107
    // Predicated region
    $region9: #{residual_module_forward.1} parent=5 // pred_check
      _
    $region10: #{residual_module_forward.1} parent=5 // pred_check_branch
      %110 = sbr.rel (%p107) target = $region12
    $region11: #{residual_module_forward.1} parent=5 // pred_region
      %s111 = ssub.s32 %s8, 1
      // Predicated region
      $region13: #{residual_module_forward.1} parent=11 // pred_check
        %p112 = pneg %p69
      $region14: #{residual_module_forward.1} parent=11 // pred_check_branch
        %114 = sbr.rel (%p112) target = $region16
      $region15: #{residual_module_forward.1} parent=11 // pred_region
        _
      $region16: #{residual_module_forward.1} parent=11 // pred_fallthru
        _
    $region12: #{residual_module_forward.1} parent=5 // pred_fallthru
      _
    %p115 = scmp.lt.s32.totalorder %s8, 2
    // Predicated region
    $region17: #{residual_module_forward.1} parent=5 // pred_check
      %p116 = pneg %p115
    $region18: #{residual_module_forward.1} parent=5 // pred_check_branch
      %118 = sbr.rel (%p116) target = $region20
    $region19: #{residual_module_forward.1} parent=5 // pred_region
      // Predicated region
      $region21: #{residual_module_forward.1} parent=19 // pred_check
        %p119 = pneg %p42
      $region22: #{residual_module_forward.1} parent=19 // pred_check_branch
        %121 = sbr.rel (%p119) target = $region24
      $region23: #{residual_module_forward.1} parent=19 // pred_region
        %s122 = smul.u32 2, %s16
        %p123 = scmp.lt.s32.totalorder %s15, 1
        %s124 = scalar_select %p123, %s15, 1
        %p125 = scmp.lt.s32.totalorder %s122, 1
        %s126 = scalar_select %p125, %s122, 1
        %s127 = smul.addr %s124, 10
        %s128 = sadd.s32 %s126, %s127
        %s129 = smul.addr %s128, 8
        %s130 = scalar_lea.vmem %s0, %s129
        %s131 = smul.u32 2, %s16
      $region24: #{residual_module_forward.1} parent=19 // pred_fallthru
        _
    $region20: #{residual_module_forward.1} parent=5 // pred_fallthru
      _
    %p132 = scmp.le.s32.totalorder 1, %s8
    %p133 = scmp.lt.s32.totalorder %s8, 3
    %p134 = pnand %p132, %p133
    %p135 = pneg %p134
    // Predicated region
    $region25: #{residual_module_forward.1} parent=5 // pred_check
      _
    $region26: #{residual_module_forward.1} parent=5 // pred_check_branch
      %137 = sbr.rel (%p134) target = $region28
    $region27: #{residual_module_forward.1} parent=5 // pred_region
      %s138 = ssub.s32 %s8, 1
      %s139 = smul.u32 2, %s18
      %p140 = scmp.lt.s32.totalorder %s17, 1
      %s141 = scalar_select %p140, %s17, 1
      %p142 = scmp.lt.s32.totalorder %s139, 1
      %s143 = scalar_select %p142, %s139, 1
      %s144 = smul.addr %s141, 10
      %s145 = sadd.s32 %s143, %s144
      %s146 = smul.addr %s145, 8
      %s147 = scalar_lea.vmem %s0, %s146
      %p148 = pneg %p48
      %p149 = pneg %p45
      %p150 = pneg %p69
      %p151 = pneg %p66
      %p152 = pneg %p97
      %p153 = pneg %p94
      %s154 = smul.u32 2, %s18
      %p155 = scmp.lt.s32.totalorder %s17, 1
      %s156 = scalar_select %p155, %s17, 1
      %p157 = scmp.lt.s32.totalorder %s154, 1
      %s158 = scalar_select %p157, %s154, 1
      %s159 = smul.addr %s156, 2
      %s160 = sadd.s32 %s158, %s159
      %s161 = smul.addr %s160, 4
      %s162 = scalar_lea.vmem %s2, %s161
      %s163 = smul.u32 2, %s18
      %p164 = scmp.lt.s32.totalorder %s17, 1
      %s165 = scalar_select %p164, %s17, 1
      %p166 = scmp.lt.s32.totalorder %s163, 1
      %s167 = scalar_select %p166, %s163, 1
      %s168 = smul.addr %s165, 10
      %s169 = sadd.s32 %s167, %s168
      %s170 = smul.addr %s169, 8
      %s171 = scalar_lea.vmem %s0, %s170
      %s172 = smul.u32 2, %s18
      %s173 = smul.u32 2, %s18
      %p174 = scmp.lt.s32.totalorder %s17, 1
      %s175 = scalar_select %p174, %s17, 1
      %p176 = scmp.lt.s32.totalorder %s173, 1
      %s177 = scalar_select %p176, %s173, 1
      %s178 = smul.addr %s175, 2
      %s179 = sadd.s32 %s177, %s178
      %s180 = smul.addr %s179, 4
      %s181 = scalar_lea.vmem %s2, %s180
      %s182 = smul.u32 2, %s18
      %v183 = vld [vmem:[%s1] sm:$0xf]
      %v184 = vld [vmem:[%s171] sm:$0xff]
      %v185 = vld [vmem:[%s171 + $0x8] sm:$0xff]
      %v186 = vld [vmem:[%s171 + $0x10] sm:$0xff]
      %v187 = vld [vmem:[%s171 + $0x18] sm:$0xff]
      %v188 = vld [vmem:[%s171 + $0x20] sm:$0xff]
      %v189 = vld [vmem:[%s171 + $0x28] sm:$0xff]
      %v190 = vld [vmem:[%s171 + $0x30] sm:$0xff]
      %v191 = vld [vmem:[%s171 + $0x38] sm:$0xff]
      %v192 = vld [vmem:[%s171 + $0x40] sm:$0xff]
      %v193 = vld [vmem:[%s171 + $0x48] sm:$0xff]
      %vm194 = vcmask 326656
      %v196 = vsel %vm194, %v183, 0
      %198 = vmatprep.subr.mxu0 0.0
      %199 = vmatpush1.msra.mxu0 0.0
      %200 = vmatprep.subr.mxu0 0.0
      %201 = vmatpush1.msra.mxu0 0.0
      %202 = vmatprep.subr.mxu0 0.0
      %203 = vmatpush1.msra.mxu0 0.0
      %204 = vmatprep.subr.mxu0 0.0
      %205 = vmatpush1.msra.mxu0 0.0
      %206 = vmatprep.subr.mxu0 0.0
      %207 = vmatpush1.msra.mxu0 0.0
      %208 = vmatprep.subr.mxu0 0.0
      %209 = vmatpush1.msra.mxu0 0.0
      %210 = vmatprep.subr.mxu0 0.0
      %211 = vmatpush1.msra.mxu0 0.0
      %212 = vmatprep.subr.mxu0 0.0
      %213 = vmatpush1.msra.mxu0 0.0
      %214 = vmatprep.subr.mxu0 0.0
      %215 = vmatpush1.msra.mxu0 0.0
      %216 = vmatprep.subr.mxu0 0.0
      %217 = vmatpush1.msra.mxu0 0.0
      %218 = vmatprep.subr.mxu0 0.0
      %219 = vmatpush1.msra.mxu0 0.0
      %220 = vmatprep.subr.mxu0 %v193
      %221 = vmatpush1.msra.mxu0 %v192
      %222 = vmatprep.subr.mxu0 %v191
      %223 = vmatpush1.msra.mxu0 %v190
      %224 = vmatprep.subr.mxu0 %v189
      %225 = vmatpush1.msra.mxu0 %v188
      %226 = vmatprep.subr.mxu0 %v187
      %227 = vmatpush1.msra.mxu0 %v186
      %228 = vmatprep.subr.mxu0 %v185
      %229 = vmatpush1.msra.mxu0 %v184
      %230 = vmatprep.subr.mxu0 0.0
      %231 = vmatpush2.msra.mxu0 0.0
      %232 = vmatprep.subr.mxu0 0.0
      %233 = vmatpush2.msra.mxu0 0.0
      %234 = vmatprep.subr.mxu0 0.0
      %235 = vmatpush2.msra.mxu0 0.0
      %236 = vmatprep.subr.mxu0 0.0
      %237 = vmatpush2.msra.mxu0 0.0
      %238 = vmatprep.subr.mxu0 0.0
      %239 = vmatpush2.msra.mxu0 0.0
      %240 = vmatprep.subr.mxu0 0.0
      %241 = vmatpush2.msra.mxu0 0.0
      %242 = vmatprep.subr.mxu0 0.0
      %243 = vmatpush2.msra.mxu0 0.0
      %244 = vmatprep.subr.mxu0 0.0
      %245 = vmatpush2.msra.mxu0 0.0
      %246 = vmatprep.subr.mxu0 0.0
      %247 = vmatpush2.msra.mxu0 0.0
      %248 = vmatprep.subr.mxu0 0.0
      %249 = vmatpush2.msra.mxu0 0.0
      %250 = vmatprep.subr.mxu0 0.0
      %251 = vmatpush2.msra.mxu0 0.0
      %252 = vmatprep.subr.mxu0 0.0
      %253 = vmatpush2.msra.mxu0 0.0
      %254 = vmatprep.subr.mxu0 0.0
      %255 = vmatpush2.msra.mxu0 0.0
      %256 = vmatprep.subr.mxu0 0.0
      %257 = vmatpush2.msra.mxu0 0.0
      %258 = vmatprep.subr.mxu0 0.0
      %259 = vmatpush2.msra.mxu0 0.0
      %260 = vmatprep.subr.mxu0 0.0
      %261 = vmatpush2.msra.mxu0 0.0
      %262 = vmatprep.mubr.f32.mxu0 0.0
      %263 = vmatmul.mubr.f32.gmra.mxu0 %v196
      %v264 = vpop.f32.mrf.mxu0
      %v265 = vadd.f32 0.0, %v264
      %v266 = vpop.f32.mrf.mxu0
      %v267 = vadd.f32 0.0, %v266
      %268 = vdwg.mxu0
      %v271 = vcombine.low %v265, %v267
      %273 = vst [vmem:[%s181] sm:$0xff] %v271
      %s274 = smul.u32 2, %s18
      %p275 = scmp.lt.s32.totalorder %s17, 1
      %s276 = scalar_select %p275, %s17, 1
      %p277 = scmp.lt.s32.totalorder %s274, 1
      %s278 = scalar_select %p277, %s274, 1
      %s279 = smul.addr %s276, 2
      %s280 = sadd.s32 %s278, %s279
      %s281 = smul.addr %s280, 4
      %s282 = scalar_lea.vmem %s2, %s281
      // Predicated region
      $region29: #{residual_module_forward.1} parent=27 // pred_check
        %p283 = pneg %p94
      $region30: #{residual_module_forward.1} parent=27 // pred_check_branch
        %285 = sbr.rel (%p283) target = $region32
      $region31: #{residual_module_forward.1} parent=27 // pred_region
        %s286 = smul.u32 2, %s18
      $region32: #{residual_module_forward.1} parent=27 // pred_fallthru
        _
    $region28: #{residual_module_forward.1} parent=5 // pred_fallthru
      _
    %p287 = scmp.le.s32.totalorder 2, %s8
    // Predicated region
    $region33: #{residual_module_forward.1} parent=5 // pred_check
      %p288 = pneg %p287
    $region34: #{residual_module_forward.1} parent=5 // pred_check_branch
      %290 = sbr.rel (%p288) target = $region36
    $region35: #{residual_module_forward.1} parent=5 // pred_region
      %s291 = ssub.s32 %s8, 2
      // Predicated region
      $region37: #{residual_module_forward.1} parent=35 // pred_check
        %p292 = pneg %p100
      $region38: #{residual_module_forward.1} parent=35 // pred_check_branch
        %294 = sbr.rel (%p292) target = $region40
      $region39: #{residual_module_forward.1} parent=35 // pred_region
        %s295 = smul.u32 2, %s20
        %p296 = scmp.lt.s32.totalorder %s19, 1
        %s297 = scalar_select %p296, %s19, 1
        %p298 = scmp.lt.s32.totalorder %s295, 1
        %s299 = scalar_select %p298, %s295, 1
        %s300 = smul.addr %s297, 2
        %s301 = sadd.s32 %s299, %s300
        %s302 = smul.addr %s301, 4
        %s303 = scalar_lea.vmem %s2, %s302
      $region40: #{residual_module_forward.1} parent=35 // pred_fallthru
        _
    $region36: #{residual_module_forward.1} parent=5 // pred_fallthru
      _
  $region6: #{residual_module_forward.1} parent=0 // loop_footer
    %s12 = sadd.s32 1, %s8
  $region7: #{residual_module_forward.1} parent=0 // loop_footer_branch
    %7 = sbr.rel target = $region3
  $region8: #{residual_module_forward.1} parent=0 // loop_exit
    _

</llo_original>
